<compile_context>
chip_gen: v5e
topology: v5e:2x2
jax: 0.10.0
libtpu: 0.0.40
codegen_flags: <defaults>
</compile_context>

<pallas_src>
import functools

import jax
import jax.numpy as jnp
from jax import lax
from jax.experimental import pallas as pl
from jax.experimental.pallas import tpu as pltpu


def _round_up(x, m):
    return ((x + m - 1) // m) * m


def _vmem_budget_bytes():
    """Scoped-VMEM cap: this generation's physical VMEM minus pipelining headroom."""
    cap = 64 * 1024 * 1024                      # conservative fallback (v7x per-TC)
    try:
        cap = int(getattr(pltpu.get_tpu_info(), "vmem_capacity_bytes", cap))
    except Exception:
        pass
    return max(cap - 16 * 1024 * 1024, cap // 2)   # ~48 MiB on v7x, ~112 MiB on v5e/v6e


def _make_conv_bn_kernel(KH, KW, Cin_p, dilation, Wp, TL):
    """Fused conv + eval-BN kernel for static geometry.

    Per (batch, lane-tile) grid step: stack the KH*KW statically shifted views of the
    flat zero-padded image window along the contraction axis in VMEM, run ONE MXU dot
    against the BN-scale-folded weights, add the BN bias, store the (OC_p, TL) tile.
    """
    taps = [ki * dilation * Wp + kj * dilation
            for ki in range(KH) for kj in range(KW)]

    def kernel(x_ref, w_ref, b_ref, o_ref, rhs_ref):
        # x_ref:   (Cin_p, TLov)         flat padded-image window (tile + halo)
        # w_ref:   (OC_p, KH*KW*Cin_p)   conv weights with BN scale folded in
        # b_ref:   (OC_p, 1)             BN bias (beta - mean * scale), f32
        # o_ref:   (OC_p, TL)            one lane tile of the dense stride-1 output
        # rhs_ref: (KH*KW*Cin_p, TL)     VMEM scratch: stacked shifted views
        for k, off in enumerate(taps):                       # static, KH*KW small
            rhs_ref[pl.ds(k * Cin_p, Cin_p), :] = x_ref[:, pl.ds(off, TL)]
        acc = jnp.dot(w_ref[...], rhs_ref[...], preferred_element_type=jnp.float32)
        # NOTE: the PyTorch forward returns bn(conv(x)) with NO ReLU, so none here.
        o_ref[...] = (acc + b_ref[...]).astype(o_ref.dtype)

    return kernel


@functools.partial(
    jax.jit,
    static_argnames=("stride", "padding", "dilation", "compute_dtype",
                     "out_dtype", "lane_tile"))
def basic_conv2d(x_nchw, weight, gamma, beta, running_mean, running_var,
                 stride=1, padding=0, dilation=1, eps=1e-5,
                 compute_dtype=jnp.float32, out_dtype=None, lane_tile=2048):
    """Forward of BasicConv2d: BN(Conv(x)) — no ReLU (matches the PyTorch forward)."""
    N, Cin, H, W = x_nchw.shape
    OC, _, KH, KW = weight.shape
    out_dtype = x_nchw.dtype if out_dtype is None else out_dtype

    Hp = H + 2 * padding
    Wp = W + 2 * padding
    OHd = Hp - dilation * (KH - 1)        # dense (stride-1) output rows
    OWd = Wp - dilation * (KW - 1)        # dense (stride-1) output cols
    assert OHd > 0 and OWd > 0

    # Flat lane-major layout: padded-image element (h, w) -> flat index h*Wp + w.
    L = OHd * Wp                          # flat dense-output length (valid cols < OWd)
    max_off = dilation * (KH - 1) * Wp + dilation * (KW - 1)
    OV = _round_up(max_off, 128)          # halo width (lane-aligned)

    # Sublane-align the channel (contraction) dim — 8 for 32-bit, 16 for 16-bit
    # packing — and the output-channel dim, so every VMEM write / store is unmasked.
    cin_align = 8 * max(1, 4 // jnp.dtype(compute_dtype).itemsize)
    Cin_p = _round_up(Cin, cin_align)
    OC_p = _round_up(OC, 8)
    Kdim = KH * KW * Cin_p

    # Pick the lane tile: as large as lane_tile allows, balanced across tiles, shrunk
    # until the (double-buffered blocks + in-kernel temporaries) fit the VMEM budget.
    isz = jnp.dtype(compute_dtype).itemsize
    osz = jnp.dtype(out_dtype).itemsize
    budget = _vmem_budget_bytes()
    TL_target = _round_up(lane_tile, 128)
    while True:
        num_l = max(1, -(-L // TL_target))            # number of lane tiles
        TL = _round_up(-(-L // num_l), 128)           # balanced tile, multiple of 128
        Lp = num_l * TL                               # padded flat output width
        TLov = TL + OV                                # tile + halo input window
        need = (2 * Cin_p * TLov * isz                # double-buffered input window
                + 2 * OC_p * max(Kdim, 128) * isz     # weights (lane-padded)
                + 2 * OC_p * 128 * 4                  # bias (lane-padded)
                + 2 * OC_p * TL * osz                 # double-buffered output tile
                + Kdim * TL * isz                     # stacked-RHS scratch
                + 2 * OC_p * TL * 4)                  # live f32 matmul/bias-add temps
        if need <= budget or TL <= 256:
            break
        TL_target = max(256, TL // 2)

    # --- glue: ONE pad(+cast); the reshape to the flat slab is contiguous (free). ---
    Hpp = -(-(Lp + OV) // Wp)             # rows so the flat slab covers every window
    xflat = jnp.pad(
        x_nchw.astype(compute_dtype),
        ((0, 0), (0, Cin_p - Cin), (padding, Hpp - H - padding), (padding, padding)),
    ).reshape(N, Cin_p, Hpp * Wp)
    # Overlapped (tile + halo) windows so all in-kernel slice offsets are static.
    # Duplication is only OV/TL (a few %), not the 9x of im2col.
    idx = (jnp.arange(num_l) * TL)[:, None] + jnp.arange(TLov)[None, :]
    xwin = jnp.swapaxes(xflat[:, :, idx], 1, 2)       # (N, num_l, Cin_p, TLov)

    # Fold eval-mode BN scale into the conv weights; only the bias add stays in-kernel.
    scale = gamma / jnp.sqrt(running_var + eps)                        # (OC,)
    bias = jnp.pad(beta - running_mean * scale, (0, OC_p - OC))
    bias = bias.reshape(OC_p, 1).astype(jnp.float32)
    w_scaled = weight * scale[:, None, None, None]                     # (OC,Cin,KH,KW)
    w_scaled = jnp.pad(w_scaled, ((0, OC_p - OC), (0, Cin_p - Cin), (0, 0), (0, 0)))
    # Column order must match the in-kernel stacking: k*Cin_p + c, with k = ki*KW + kj.
    w2d = jnp.transpose(w_scaled, (0, 2, 3, 1)).reshape(OC_p, Kdim).astype(compute_dtype)

    kernel = _make_conv_bn_kernel(KH, KW, Cin_p, dilation, Wp, TL)
    compiler_params = pltpu.CompilerParams(
        dimension_semantics=("parallel", "parallel"),
        vmem_limit_bytes=int(min(budget, max(2 * need, 16 * 1024 * 1024))))

    # --- hot path: one stacked-K MXU dot + BN bias per (batch, lane-tile) step. ---
    out_flat = pl.pallas_call(
        kernel,
        out_shape=jax.ShapeDtypeStruct((N, OC_p, Lp), out_dtype),
        grid_spec=pltpu.PrefetchScalarGridSpec(
            num_scalar_prefetch=0,
            grid=(N, num_l),
            in_specs=[
                pl.BlockSpec((None, None, Cin_p, TLov), lambda n, l: (n, l, 0, 0)),
                pl.BlockSpec((OC_p, Kdim), lambda n, l: (0, 0)),
                pl.BlockSpec((OC_p, 1), lambda n, l: (0, 0)),
            ],
            out_specs=pl.BlockSpec((None, OC_p, TL), lambda n, l: (n, 0, l)),
            scratch_shapes=[pltpu.VMEM((Kdim, TL), compute_dtype)],
        ),
        compiler_params=compiler_params,
    )(xwin, w2d, bias)

    # Crop the flat dense output back to NCHW; apply stride by subsampling.
    dense = out_flat[:, :OC, :L].reshape(N, OC, OHd, Wp)[:, :, :, :OWd]
    return dense[:, :, ::stride, ::stride]


if __name__ == "__main__":
    # BasicConv2d(in_planes=4, out_planes=8, kernel_size=3, stride=1, padding=1)
    N, Cin, H, W = 2, 4, 16, 16
    OC, KH, KW = 8, 3, 3
    stride, padding, dilation = 1, 1, 1
    eps = 1e-5

    key = jax.random.PRNGKey(0)
    k1, k2, k3, k4, k5, k6 = jax.random.split(key, 6)
    x = jax.random.normal(k1, (N, Cin, H, W), dtype=jnp.float32)
    weight = 0.1 * jax.random.normal(k2, (OC, Cin, KH, KW), dtype=jnp.float32)
    gamma = 1.0 + 0.1 * jax.random.normal(k3, (OC,), dtype=jnp.float32)
    beta = 0.1 * jax.random.normal(k4, (OC,), dtype=jnp.float32)
    running_mean = 0.1 * jax.random.normal(k5, (OC,), dtype=jnp.float32)
    running_var = 1.0 + 0.1 * jax.random.uniform(k6, (OC,), dtype=jnp.float32)

    out = basic_conv2d(x, weight, gamma, beta, running_mean, running_var,
                       stride=stride, padding=padding, dilation=dilation, eps=eps)
    out = jax.block_until_ready(out)

    # Reference: conv via XLA + eval-mode BN in plain JAX.
    conv_ref = lax.conv_general_dilated(
        x, weight, window_strides=(stride, stride),
        padding=[(padding, padding), (padding, padding)],
        rhs_dilation=(dilation, dilation),
        dimension_numbers=("NCHW", "OIHW", "NCHW"))
    scale = gamma / jnp.sqrt(running_var + eps)
    ref = conv_ref * scale[None, :, None, None] + \
        (beta - running_mean * scale)[None, :, None, None]

    assert out.shape == (N, OC, H, W), out.shape
    assert jnp.allclose(out, ref, atol=1e-4, rtol=1e-4), \
        float(jnp.max(jnp.abs(out - ref)))

    # bf16 operands + bf16 writeback with f32 accumulation (halves HBM traffic on every
    # generation; v5e benefits most). Loose tolerance check.
    out_bf16 = basic_conv2d(x, weight, gamma, beta, running_mean, running_var,
                            stride=stride, padding=padding, dilation=dilation,
                            eps=eps, compute_dtype=jnp.bfloat16,
                            out_dtype=jnp.bfloat16)
    out_bf16 = jax.block_until_ready(out_bf16)
    assert out_bf16.shape == (N, OC, H, W)
    assert jnp.allclose(out_bf16.astype(jnp.float32), ref, atol=1e-1, rtol=1e-1), \
        float(jnp.max(jnp.abs(out_bf16.astype(jnp.float32) - ref)))

    print("KERNEL_OK")
</pallas_src>

<mosaic_0001>
module attributes {stable_mosaic.version = 11 : i64} {
  func.func @kernel(%arg0: i32, %arg1: i32, %arg2: memref<1x1x8x512xf32, #tpu.memory_space<vmem>>, %arg3: memref<8x72xf32, #tpu.memory_space<vmem>>, %arg4: memref<8x1xf32, #tpu.memory_space<vmem>>, %arg5: memref<1x8x384xf32, #tpu.memory_space<vmem>>, %arg6: memref<72x384xf32, #tpu.memory_space<vmem>>) attributes {dimension_semantics = [#tpu.dimension_semantics<parallel>, #tpu.dimension_semantics<parallel>], iteration_bounds = array<i64: 2, 1>, scalar_prefetch = 0 : i64, scratch_operands = 1 : i64, tpu.core_type = #tpu.core_type<tc>, window_params = [{transform_indices = @transform_0, window_bounds = array<i64: 1, 1, 8, 512>}, {pipeline_mode = #tpu.pipeline_mode<synchronous>, transform_indices = @transform_1, window_bounds = array<i64: 8, 72>}, {pipeline_mode = #tpu.pipeline_mode<synchronous>, transform_indices = @transform_2, window_bounds = array<i64: 8, 1>}, {transform_indices = @transform_3, window_bounds = array<i64: 1, 8, 384>}]} {
    %c0 = arith.constant 0 : index
    %c0_0 = arith.constant 0 : index
    %c0_1 = arith.constant 0 : index
    %c0_2 = arith.constant 0 : index
    %0 = vector.load %arg2[%c0, %c0_0, %c0_1, %c0_2] : memref<1x1x8x512xf32, #tpu.memory_space<vmem>>, vector<1x1x8x384xf32>
    %1 = vector.shape_cast %0 : vector<1x1x8x384xf32> to vector<8x384xf32>
    %c0_3 = arith.constant 0 : index
    %c0_4 = arith.constant 0 : index
    %2 = vector.load %arg6[%c0_3, %c0_4] : memref<72x384xf32, #tpu.memory_space<vmem>>, vector<8x384xf32>
    tpu.vector_store %arg6[%c0_3, %c0_4], %1 {strides = array<i32>} : memref<72x384xf32, #tpu.memory_space<vmem>>, vector<8x384xf32>,
    %c0_5 = arith.constant 0 : index
    %c0_6 = arith.constant 0 : index
    %c0_7 = arith.constant 0 : index
    %c1 = arith.constant 1 : index
    %3 = vector.load %arg2[%c0_5, %c0_6, %c0_7, %c1] : memref<1x1x8x512xf32, #tpu.memory_space<vmem>>, vector<1x1x8x384xf32>
    %4 = vector.shape_cast %3 : vector<1x1x8x384xf32> to vector<8x384xf32>
    %c8 = arith.constant 8 : index
    %c0_8 = arith.constant 0 : index
    %5 = vector.load %arg6[%c8, %c0_8] : memref<72x384xf32, #tpu.memory_space<vmem>>, vector<8x384xf32>
    tpu.vector_store %arg6[%c8, %c0_8], %4 {strides = array<i32>} : memref<72x384xf32, #tpu.memory_space<vmem>>, vector<8x384xf32>,
    %c0_9 = arith.constant 0 : index
    %c0_10 = arith.constant 0 : index
    %c0_11 = arith.constant 0 : index
    %c2 = arith.constant 2 : index
    %6 = vector.load %arg2[%c0_9, %c0_10, %c0_11, %c2] : memref<1x1x8x512xf32, #tpu.memory_space<vmem>>, vector<1x1x8x384xf32>
    %7 = vector.shape_cast %6 : vector<1x1x8x384xf32> to vector<8x384xf32>
    %c16 = arith.constant 16 : index
    %c0_12 = arith.constant 0 : index
    %8 = vector.load %arg6[%c16, %c0_12] : memref<72x384xf32, #tpu.memory_space<vmem>>, vector<8x384xf32>
    tpu.vector_store %arg6[%c16, %c0_12], %7 {strides = array<i32>} : memref<72x384xf32, #tpu.memory_space<vmem>>, vector<8x384xf32>,
    %c0_13 = arith.constant 0 : index
    %c0_14 = arith.constant 0 : index
    %c0_15 = arith.constant 0 : index
    %c18 = arith.constant 18 : index
    %9 = vector.load %arg2[%c0_13, %c0_14, %c0_15, %c18] : memref<1x1x8x512xf32, #tpu.memory_space<vmem>>, vector<1x1x8x384xf32>
    %10 = vector.shape_cast %9 : vector<1x1x8x384xf32> to vector<8x384xf32>
    %c24 = arith.constant 24 : index
    %c0_16 = arith.constant 0 : index
    %11 = vector.load %arg6[%c24, %c0_16] : memref<72x384xf32, #tpu.memory_space<vmem>>, vector<8x384xf32>
    tpu.vector_store %arg6[%c24, %c0_16], %10 {strides = array<i32>} : memref<72x384xf32, #tpu.memory_space<vmem>>, vector<8x384xf32>,
    %c0_17 = arith.constant 0 : index
    %c0_18 = arith.constant 0 : index
    %c0_19 = arith.constant 0 : index
    %c19 = arith.constant 19 : index
    %12 = vector.load %arg2[%c0_17, %c0_18, %c0_19, %c19] : memref<1x1x8x512xf32, #tpu.memory_space<vmem>>, vector<1x1x8x384xf32>
    %13 = vector.shape_cast %12 : vector<1x1x8x384xf32> to vector<8x384xf32>
    %c32 = arith.constant 32 : index
    %c0_20 = arith.constant 0 : index
    %14 = vector.load %arg6[%c32, %c0_20] : memref<72x384xf32, #tpu.memory_space<vmem>>, vector<8x384xf32>
    tpu.vector_store %arg6[%c32, %c0_20], %13 {strides = array<i32>} : memref<72x384xf32, #tpu.memory_space<vmem>>, vector<8x384xf32>,
    %c0_21 = arith.constant 0 : index
    %c0_22 = arith.constant 0 : index
    %c0_23 = arith.constant 0 : index
    %c20 = arith.constant 20 : index
    %15 = vector.load %arg2[%c0_21, %c0_22, %c0_23, %c20] : memref<1x1x8x512xf32, #tpu.memory_space<vmem>>, vector<1x1x8x384xf32>
    %16 = vector.shape_cast %15 : vector<1x1x8x384xf32> to vector<8x384xf32>
    %c40 = arith.constant 40 : index
    %c0_24 = arith.constant 0 : index
    %17 = vector.load %arg6[%c40, %c0_24] : memref<72x384xf32, #tpu.memory_space<vmem>>, vector<8x384xf32>
    tpu.vector_store %arg6[%c40, %c0_24], %16 {strides = array<i32>} : memref<72x384xf32, #tpu.memory_space<vmem>>, vector<8x384xf32>,
    %c0_25 = arith.constant 0 : index
    %c0_26 = arith.constant 0 : index
    %c0_27 = arith.constant 0 : index
    %c36 = arith.constant 36 : index
    %18 = vector.load %arg2[%c0_25, %c0_26, %c0_27, %c36] : memref<1x1x8x512xf32, #tpu.memory_space<vmem>>, vector<1x1x8x384xf32>
    %19 = vector.shape_cast %18 : vector<1x1x8x384xf32> to vector<8x384xf32>
    %c48 = arith.constant 48 : index
    %c0_28 = arith.constant 0 : index
    %20 = vector.load %arg6[%c48, %c0_28] : memref<72x384xf32, #tpu.memory_space<vmem>>, vector<8x384xf32>
    tpu.vector_store %arg6[%c48, %c0_28], %19 {strides = array<i32>} : memref<72x384xf32, #tpu.memory_space<vmem>>, vector<8x384xf32>,
    %c0_29 = arith.constant 0 : index
    %c0_30 = arith.constant 0 : index
    %c0_31 = arith.constant 0 : index
    %c37 = arith.constant 37 : index
    %21 = vector.load %arg2[%c0_29, %c0_30, %c0_31, %c37] : memref<1x1x8x512xf32, #tpu.memory_space<vmem>>, vector<1x1x8x384xf32>
    %22 = vector.shape_cast %21 : vector<1x1x8x384xf32> to vector<8x384xf32>
    %c56 = arith.constant 56 : index
    %c0_32 = arith.constant 0 : index
    %23 = vector.load %arg6[%c56, %c0_32] : memref<72x384xf32, #tpu.memory_space<vmem>>, vector<8x384xf32>
    tpu.vector_store %arg6[%c56, %c0_32], %22 {strides = array<i32>} : memref<72x384xf32, #tpu.memory_space<vmem>>, vector<8x384xf32>,
    %c0_33 = arith.constant 0 : index
    %c0_34 = arith.constant 0 : index
    %c0_35 = arith.constant 0 : index
    %c38 = arith.constant 38 : index
    %24 = vector.load %arg2[%c0_33, %c0_34, %c0_35, %c38] : memref<1x1x8x512xf32, #tpu.memory_space<vmem>>, vector<1x1x8x384xf32>
    %25 = vector.shape_cast %24 : vector<1x1x8x384xf32> to vector<8x384xf32>
    %c64 = arith.constant 64 : index
    %c0_36 = arith.constant 0 : index
    %26 = vector.load %arg6[%c64, %c0_36] : memref<72x384xf32, #tpu.memory_space<vmem>>, vector<8x384xf32>
    tpu.vector_store %arg6[%c64, %c0_36], %25 {strides = array<i32>} : memref<72x384xf32, #tpu.memory_space<vmem>>, vector<8x384xf32>,
    %c0_37 = arith.constant 0 : index
    %c0_38 = arith.constant 0 : index
    %27 = vector.load %arg3[%c0_37, %c0_38] : memref<8x72xf32, #tpu.memory_space<vmem>>, vector<8x72xf32>
    %c0_39 = arith.constant 0 : index
    %c0_40 = arith.constant 0 : index
    %28 = vector.load %arg6[%c0_39, %c0_40] : memref<72x384xf32, #tpu.memory_space<vmem>>, vector<72x384xf32>
    %cst = arith.constant dense<0.000000e+00> : vector<8x384xf32>
    %29 = tpu.matmul %27, %28, %cst {dimension_numbers = #tpu.dot_dimension_numbers<[1], [0], [0], [1], [0, 0, 1, 1], [], []>} : vector<8x72xf32>, vector<72x384xf32>, vector<8x384xf32> -> vector<8x384xf32>
    %c0_41 = arith.constant 0 : index
    %c0_42 = arith.constant 0 : index
    %30 = vector.load %arg4[%c0_41, %c0_42] : memref<8x1xf32, #tpu.memory_space<vmem>>, vector<8x1xf32>
    %31 = vector.broadcast %30 : vector<8x1xf32> to vector<8x384xf32>
    %32 = arith.addf %29, %31 : vector<8x384xf32>
    %c0_43 = arith.constant 0 : index
    %c0_44 = arith.constant 0 : index
    %c0_45 = arith.constant 0 : index
    %33 = vector.load %arg5[%c0_43, %c0_44, %c0_45] : memref<1x8x384xf32, #tpu.memory_space<vmem>>, vector<1x8x384xf32>
    %34 = vector.shape_cast %33 : vector<1x8x384xf32> to vector<8x384xf32>
    %35 = vector.shape_cast %32 : vector<8x384xf32> to vector<1x8x384xf32>
    tpu.vector_store %arg5[%c0_43, %c0_44, %c0_45], %35 {strides = array<i32>} : memref<1x8x384xf32, #tpu.memory_space<vmem>>, vector<1x8x384xf32>,
    return
  }
  func.func @transform_0(%arg0: i32, %arg1: i32) -> (i32, i32, i32, i32) {
    %c0_i32 = arith.constant 0 : i32
    %c0_i32_0 = arith.constant 0 : i32
    %c0_i32_1 = arith.constant 0 : i32
    return %arg0, %arg1, %c0_i32, %c0_i32_0 : i32, i32, i32, i32
  }
  func.func @transform_1(%arg0: i32, %arg1: i32) -> (i32, i32) {
    %c0_i32 = arith.constant 0 : i32
    %c0_i32_0 = arith.constant 0 : i32
    %c0_i32_1 = arith.constant 0 : i32
    return %c0_i32, %c0_i32_0 : i32, i32
  }
  func.func @transform_2(%arg0: i32, %arg1: i32) -> (i32, i32) {
    %c0_i32 = arith.constant 0 : i32
    %c0_i32_0 = arith.constant 0 : i32
    %c0_i32_1 = arith.constant 0 : i32
    return %c0_i32, %c0_i32_0 : i32, i32
  }
  func.func @transform_3(%arg0: i32, %arg1: i32) -> (i32, i32, i32) {
    %c0_i32 = arith.constant 0 : i32
    %c0_i32_0 = arith.constant 0 : i32
    return %arg0, %c0_i32, %arg1 : i32, i32, i32
  }
}

</mosaic_0001>

<llo_original>
// kernel: basic_conv2d.1
$region0: #{basic_conv2d.1}
  #allocation0 [shape = 'u32[]', space=smem, size = 0x4, offset = 0x4, fixed_abs, tag = 'smem constant byte address 0x4 - core index']
  #allocation1 [shape = 'u32[72,128]{1,0:T(1,128)}', space=vmem, size = 0x9000, scoped, tag = 'internal scratch']
  #allocation2 [shape = 'f32[72,384]{1,0:T(8,128)}', space=vmem, size = 0x1b000, scoped, tag = 'scratch operand']
  %s0 = inlined_call_operand.vmem [shape: f32[2,1,8,512], index: 0, kind: input, shape index: {}]
  %s1 = inlined_call_operand.vmem [shape: f32[8,72], index: 1, kind: input, shape index: {}]
  %s2 = inlined_call_operand.vmem [shape: f32[8,1], index: 2, kind: input, shape index: {}]
  %s3 = inlined_call_operand.vmem [shape: f32[2,8,384], index: 3, kind: output, shape index: {}]
  %s4 = sld [smem:[#allocation0]]
  $region45: #{basic_conv2d.1} parent=0
    _
  %s6 = ssub.s32 1, %s4
  %s7 = scalar_select 0, %s6, %s4
  loop: start=0, step=1, limit=4
  $region2: #{basic_conv2d.1} parent=0 // loop_pre_header
    _
  $region3: #{basic_conv2d.1} parent=0 // loop_header
    %s9 = sphi 0, %s13
    %p10 = scmp.ge.s32.totalorder %s9, 4
    %s16 = sphi 0, %s28
    %s17 = sphi 0, %s24
    %s18 = sphi 0, %s16
    %s19 = sphi 0, %s17
    %s20 = sphi 0, %s18
    %s21 = sphi 0, %s19
    %s33 = sphi 0, %s35
    %s36 = sphi 0, %s33
    %s37 = sphi 0, %s36
    %s53 = sphi 0, %s37
    %s57 = sphi 0, %s57
    %s59 = sphi 0, %s57
    %s60 = sphi 0, %s59
    %s74 = sphi 0, %s60
    %s78 = sphi 0, %s78
    %s80 = sphi 0, %s78
    %s81 = sphi 0, %s80
    %s95 = sphi 0, %s81
    %s103 = sphi 0, %s105
    %s106 = sphi 0, %s103
    %s107 = sphi 0, %s106
    %s123 = sphi 0, %s107
  $region4: #{basic_conv2d.1} parent=0 // loop_header_branch
    %12 = sbr.rel (%p10) target = $region8
  $region5: #{basic_conv2d.1} parent=0 // loop_body
    %s14 = ssub.s32 %s9, 1
    %s15 = ssub.s32 %s9, 2
    %s22 = sadd.s32 1, %s17
    %p23 = scmp.ge.s32.totalorder %s22, 1
    %s24 = scalar_select %p23, 0, %s22
    %s25 = sadd.s32 1, %s16
    %s26 = scalar_select %p23, %s25, %s16
    %p27 = scmp.ge.s32.totalorder %s26, 2
    %s28 = scalar_select %p27, 0, %s26
    %s29 = ssub.s32 %s16, %s28
    %s30 = ssub.s32 %s17, %s24
    %s31 = sor.u32 %s29, %s30
    %p32 = scmp.eq.s32.totalorder %s31, 0
    %s34 = sadd.s32 %s33, 1
    %s35 = scalar_select %p32, %s33, %s34
    %p38 = pneg %p32
    %p39 = scmp.eq.s32.totalorder %s9, 1
    %p40 = por %p38, %p39
    %p41 = scmp.ne.s32.totalorder %s33, %s36
    %p42 = scmp.eq.s32.totalorder %s9, 0
    %p43 = por %p41, %p42
    %p44 = scmp.ne.s32.totalorder %s33, %s36
    %p45 = scmp.eq.s32.totalorder %s14, 1
    %p46 = por %p44, %p45
    %p47 = scmp.ne.s32.totalorder %s36, %s37
    %p48 = scmp.eq.s32.totalorder %s14, 0
    %p49 = por %p47, %p48
    %p50 = scmp.ne.s32.totalorder %s36, %s37
    %p51 = scmp.eq.s32.totalorder %s15, 1
    %p52 = por %p50, %p51
    %p54 = scmp.ne.s32.totalorder %s37, %s53
    %p55 = scmp.eq.s32.totalorder %s15, 0
    %p56 = por %p54, %p55
    %s58 = sadd.s32 %s57, 1
    %p61 = scmp.eq.s32.totalorder %s9, 1
    %p62 = scmp.ne.s32.totalorder %s57, %s59
    %p63 = scmp.eq.s32.totalorder %s9, 0
    %p64 = por %p62, %p63
    %p65 = scmp.ne.s32.totalorder %s57, %s59
    %p66 = scmp.eq.s32.totalorder %s14, 1
    %p67 = por %p65, %p66
    %p68 = scmp.ne.s32.totalorder %s59, %s60
    %p69 = scmp.eq.s32.totalorder %s14, 0
    %p70 = por %p68, %p69
    %p71 = scmp.ne.s32.totalorder %s59, %s60
    %p72 = scmp.eq.s32.totalorder %s15, 1
    %p73 = por %p71, %p72
    %p75 = scmp.ne.s32.totalorder %s60, %s74
    %p76 = scmp.eq.s32.totalorder %s15, 0
    %p77 = por %p75, %p76
    %s79 = sadd.s32 %s78, 1
    %p82 = scmp.eq.s32.totalorder %s9, 1
    %p83 = scmp.ne.s32.totalorder %s78, %s80
    %p84 = scmp.eq.s32.totalorder %s9, 0
    %p85 = por %p83, %p84
    %p86 = scmp.ne.s32.totalorder %s78, %s80
    %p87 = scmp.eq.s32.totalorder %s14, 1
    %p88 = por %p86, %p87
    %p89 = scmp.ne.s32.totalorder %s80, %s81
    %p90 = scmp.eq.s32.totalorder %s14, 0
    %p91 = por %p89, %p90
    %p92 = scmp.ne.s32.totalorder %s80, %s81
    %p93 = scmp.eq.s32.totalorder %s15, 1
    %p94 = por %p92, %p93
    %p96 = scmp.ne.s32.totalorder %s81, %s95
    %p97 = scmp.eq.s32.totalorder %s15, 0
    %p98 = por %p96, %p97
    %s99 = ssub.s32 %s16, %s28
    %s100 = ssub.s32 %s17, %s24
    %s101 = sor.u32 %s99, %s100
    %p102 = scmp.eq.s32.totalorder %s101, 0
    %s104 = sadd.s32 %s103, 1
    %s105 = scalar_select %p102, %s103, %s104
    %p108 = pneg %p102
    %p109 = scmp.eq.s32.totalorder %s9, 1
    %p110 = por %p108, %p109
    %p111 = scmp.ne.s32.totalorder %s103, %s106
    %p112 = scmp.eq.s32.totalorder %s9, 0
    %p113 = por %p111, %p112
    %p114 = scmp.ne.s32.totalorder %s103, %s106
    %p115 = scmp.eq.s32.totalorder %s14, 1
    %p116 = por %p114, %p115
    %p117 = scmp.ne.s32.totalorder %s106, %s107
    %p118 = scmp.eq.s32.totalorder %s14, 0
    %p119 = por %p117, %p118
    %p120 = scmp.ne.s32.totalorder %s106, %s107
    %p121 = scmp.eq.s32.totalorder %s15, 1
    %p122 = por %p120, %p121
    %p124 = scmp.ne.s32.totalorder %s107, %s123
    %p125 = scmp.eq.s32.totalorder %s15, 0
    %p126 = por %p124, %p125
    %p127 = scmp.le.s32.totalorder 1, %s9
    %p128 = scmp.lt.s32.totalorder %s9, 3
    %p129 = pnand %p127, %p128
    %p130 = pneg %p129
    // Predicated region
    $region9: #{basic_conv2d.1} parent=5 // pred_check
      _
    $region10: #{basic_conv2d.1} parent=5 // pred_check_branch
      %132 = sbr.rel (%p129) target = $region12
    $region11: #{basic_conv2d.1} parent=5 // pred_region
      %s133 = ssub.s32 %s9, 1
      // Predicated region
      $region13: #{basic_conv2d.1} parent=11 // pred_check
        %p134 = pneg %p70
      $region14: #{basic_conv2d.1} parent=11 // pred_check_branch
        %136 = sbr.rel (%p134) target = $region16
      $region15: #{basic_conv2d.1} parent=11 // pred_region
        _
      $region16: #{basic_conv2d.1} parent=11 // pred_fallthru
        _
      // Predicated region
      $region17: #{basic_conv2d.1} parent=11 // pred_check
        %p137 = pneg %p91
      $region18: #{basic_conv2d.1} parent=11 // pred_check_branch
        %139 = sbr.rel (%p137) target = $region20
      $region19: #{basic_conv2d.1} parent=11 // pred_region
        _
      $region20: #{basic_conv2d.1} parent=11 // pred_fallthru
        _
    $region12: #{basic_conv2d.1} parent=5 // pred_fallthru
      _
    %p140 = scmp.lt.s32.totalorder %s9, 2
    // Predicated region
    $region21: #{basic_conv2d.1} parent=5 // pred_check
      %p141 = pneg %p140
    $region22: #{basic_conv2d.1} parent=5 // pred_check_branch
      %143 = sbr.rel (%p141) target = $region24
    $region23: #{basic_conv2d.1} parent=5 // pred_region
      // Predicated region
      $region25: #{basic_conv2d.1} parent=23 // pred_check
        %p144 = pneg %p43
      $region26: #{basic_conv2d.1} parent=23 // pred_check_branch
        %146 = sbr.rel (%p144) target = $region28
      $region27: #{basic_conv2d.1} parent=23 // pred_region
        %p147 = scmp.lt.s32.totalorder %s16, 1
        %s148 = scalar_select %p147, %s16, 1
        %p149 = scmp.lt.s32.totalorder %s17, 0
        %s150 = scalar_select %p149, %s17, 0
        %s151 = smul.addr %s150, 4
        %s152 = smul.addr %s148, 4
        %s153 = sadd.s32 %s151, %s152
        %s154 = smul.addr %s153, 8
        %s155 = scalar_lea.vmem %s0, %s154
      $region28: #{basic_conv2d.1} parent=23 // pred_fallthru
        _
    $region24: #{basic_conv2d.1} parent=5 // pred_fallthru
      _
    %p156 = scmp.le.s32.totalorder 1, %s9
    %p157 = scmp.lt.s32.totalorder %s9, 3
    %p158 = pnand %p156, %p157
    %p159 = pneg %p158
    // Predicated region
    $region29: #{basic_conv2d.1} parent=5 // pred_check
      _
    $region30: #{basic_conv2d.1} parent=5 // pred_check_branch
      %161 = sbr.rel (%p158) target = $region32
    $region31: #{basic_conv2d.1} parent=5 // pred_region
      %s162 = ssub.s32 %s9, 1
      %p163 = scmp.lt.s32.totalorder %s18, 1
      %s164 = scalar_select %p163, %s18, 1
      %p165 = scmp.lt.s32.totalorder %s19, 0
      %s166 = scalar_select %p165, %s19, 0
      %s167 = smul.addr %s166, 4
      %s168 = smul.addr %s164, 4
      %s169 = sadd.s32 %s167, %s168
      %s170 = smul.addr %s169, 8
      %s171 = scalar_lea.vmem %s0, %s170
      %p172 = pneg %p49
      %p173 = pneg %p46
      %p174 = pneg %p70
      %p175 = pneg %p67
      %p176 = pneg %p91
      %p177 = pneg %p88
      %p178 = pneg %p119
      %p179 = pneg %p116
      %s180 = smul.u32 3, %s19
      %p181 = scmp.lt.s32.totalorder %s18, 1
      %s182 = scalar_select %p181, %s18, 1
      %p183 = scmp.lt.s32.totalorder %s180, 2
      %s184 = scalar_select %p183, %s180, 2
      %s185 = smul.addr %s182, 3
      %s186 = sadd.s32 %s184, %s185
      %s187 = smul.addr %s186, 8
      %s188 = scalar_lea.vmem %s3, %s187
      %p189 = scmp.lt.s32.totalorder %s18, 1
      %s190 = scalar_select %p189, %s18, 1
      %p191 = scmp.lt.s32.totalorder %s19, 0
      %s192 = scalar_select %p191, %s19, 0
      %s193 = smul.addr %s192, 4
      %s194 = smul.addr %s190, 4
      %s195 = sadd.s32 %s193, %s194
      %s196 = smul.addr %s195, 8
      %s197 = scalar_lea.vmem %s0, %s196
      %s198 = smul.u32 3, %s19
      %p199 = scmp.lt.s32.totalorder %s18, 1
      %s200 = scalar_select %p199, %s18, 1
      %p201 = scmp.lt.s32.totalorder %s198, 2
      %s202 = scalar_select %p201, %s198, 2
      %s203 = smul.addr %s200, 3
      %s204 = sadd.s32 %s202, %s203
      %s205 = smul.addr %s204, 8
      %s206 = scalar_lea.vmem %s3, %s205
      %s207 = smul.u32 3, %s19
      %v208 = vld [vmem:[%s197] sm:$0xff]
      %v209 = vld [vmem:[%s197 + $0x8] sm:$0xff]
      %v210 = vld [vmem:[%s197 + $0x10] sm:$0xff]
      %211 = vst [vmem:[#allocation2] sm:$0xff] %v208
      %212 = vst [vmem:[#allocation2 + $0x8] sm:$0xff] %v209
      %213 = vst [vmem:[#allocation2 + $0x10] sm:$0xff] %v210
      %v214 = vld [vmem:[%s197] sm:$0xff]
      %v215 = vld [vmem:[%s197 + $0x8] sm:$0xff]
      %v216 = vld [vmem:[%s197 + $0x10] sm:$0xff]
      %v217 = vld [vmem:[%s197 + $0x18] sm:$0xff]
      %222 = vrot.lane.b32.xlu0 %v214, 127
      %v223 = vpop.permute.xlu0 %222
      %224 = vrot.lane.b32.xlu0 %v215, 127
      %v225 = vpop.permute.xlu0 %224
      %226 = vrot.lane.b32.xlu0 %v216, 127
      %v227 = vpop.permute.xlu0 %226
      %228 = vrot.lane.b32.xlu0 %v217, 127
      %v229 = vpop.permute.xlu0 %228
      %vm230 = vcmask 1039360
      %v231 = vsel %vm230, %v223, %v225
      %v232 = vsel %vm230, %v225, %v227
      %v233 = vsel %vm230, %v227, %v229
      %237 = vst [vmem:[#allocation2 + $0x18] sm:$0xff] %v231
      %238 = vst [vmem:[#allocation2 + $0x20] sm:$0xff] %v232
      %239 = vst [vmem:[#allocation2 + $0x28] sm:$0xff] %v233
      %v240 = vld [vmem:[%s197] sm:$0xff]
      %v241 = vld [vmem:[%s197 + $0x8] sm:$0xff]
      %v242 = vld [vmem:[%s197 + $0x10] sm:$0xff]
      %v243 = vld [vmem:[%s197 + $0x18] sm:$0xff]
      %248 = vrot.lane.b32.xlu0 %v240, 126
      %v249 = vpop.permute.xlu0 %248
      %250 = vrot.lane.b32.xlu0 %v241, 126
      %v251 = vpop.permute.xlu0 %250
      %252 = vrot.lane.b32.xlu0 %v242, 126
      %v253 = vpop.permute.xlu0 %252
      %254 = vrot.lane.b32.xlu0 %v243, 126
      %v255 = vpop.permute.xlu0 %254
      %vm256 = vcmask 1031168
      %v257 = vsel %vm256, %v249, %v251
      %v258 = vsel %vm256, %v251, %v253
      %v259 = vsel %vm256, %v253, %v255
      %263 = vst [vmem:[#allocation2 + $0x30] sm:$0xff] %v257
      %264 = vst [vmem:[#allocation2 + $0x38] sm:$0xff] %v258
      %265 = vst [vmem:[#allocation2 + $0x40] sm:$0xff] %v259
      %v266 = vld [vmem:[%s197] sm:$0xff]
      %v267 = vld [vmem:[%s197 + $0x8] sm:$0xff]
      %v268 = vld [vmem:[%s197 + $0x10] sm:$0xff]
      %v269 = vld [vmem:[%s197 + $0x18] sm:$0xff]
      %274 = vrot.lane.b32.xlu0 %v266, 110
      %v275 = vpop.permute.xlu0 %274
      %276 = vrot.lane.b32.xlu0 %v267, 110
      %v277 = vpop.permute.xlu0 %276
      %278 = vrot.lane.b32.xlu0 %v268, 110
      %v279 = vpop.permute.xlu0 %278
      %280 = vrot.lane.b32.xlu0 %v269, 110
      %v281 = vpop.permute.xlu0 %280
      %vm282 = vcmask 900096
      %v283 = vsel %vm282, %v275, %v277
      %v284 = vsel %vm282, %v277, %v279
      %v285 = vsel %vm282, %v279, %v281
      %289 = vst [vmem:[#allocation2 + $0x48] sm:$0xff] %v283
      %290 = vst [vmem:[#allocation2 + $0x50] sm:$0xff] %v284
      %291 = vst [vmem:[#allocation2 + $0x58] sm:$0xff] %v285
      %v292 = vld [vmem:[%s197] sm:$0xff]
      %v293 = vld [vmem:[%s197 + $0x8] sm:$0xff]
      %v294 = vld [vmem:[%s197 + $0x10] sm:$0xff]
      %v295 = vld [vmem:[%s197 + $0x18] sm:$0xff]
      %300 = vrot.lane.b32.xlu0 %v292, 109
      %v301 = vpop.permute.xlu0 %300
      %302 = vrot.lane.b32.xlu0 %v293, 109
      %v303 = vpop.permute.xlu0 %302
      %304 = vrot.lane.b32.xlu0 %v294, 109
      %v305 = vpop.permute.xlu0 %304
      %306 = vrot.lane.b32.xlu0 %v295, 109
      %v307 = vpop.permute.xlu0 %306
      %vm308 = vcmask 891904
      %v309 = vsel %vm308, %v301, %v303
      %v310 = vsel %vm308, %v303, %v305
      %v311 = vsel %vm308, %v305, %v307
      %315 = vst [vmem:[#allocation2 + $0x60] sm:$0xff] %v309
      %316 = vst [vmem:[#allocation2 + $0x68] sm:$0xff] %v310
      %317 = vst [vmem:[#allocation2 + $0x70] sm:$0xff] %v311
      %v318 = vld [vmem:[%s197] sm:$0xff]
      %v319 = vld [vmem:[%s197 + $0x8] sm:$0xff]
      %v320 = vld [vmem:[%s197 + $0x10] sm:$0xff]
      %v321 = vld [vmem:[%s197 + $0x18] sm:$0xff]
      %326 = vrot.lane.b32.xlu0 %v318, 108
      %v327 = vpop.permute.xlu0 %326
      %328 = vrot.lane.b32.xlu0 %v319, 108
      %v329 = vpop.permute.xlu0 %328
      %330 = vrot.lane.b32.xlu0 %v320, 108
      %v331 = vpop.permute.xlu0 %330
      %332 = vrot.lane.b32.xlu0 %v321, 108
      %v333 = vpop.permute.xlu0 %332
      %vm334 = vcmask 883712
      %v335 = vsel %vm334, %v327, %v329
      %v336 = vsel %vm334, %v329, %v331
      %v337 = vsel %vm334, %v331, %v333
      %341 = vst [vmem:[#allocation2 + $0x78] sm:$0xff] %v335
      %342 = vst [vmem:[#allocation2 + $0x80] sm:$0xff] %v336
      %343 = vst [vmem:[#allocation2 + $0x88] sm:$0xff] %v337
      %v344 = vld [vmem:[%s197] sm:$0xff]
      %v345 = vld [vmem:[%s197 + $0x8] sm:$0xff]
      %v346 = vld [vmem:[%s197 + $0x10] sm:$0xff]
      %v347 = vld [vmem:[%s197 + $0x18] sm:$0xff]
      %352 = vrot.lane.b32.xlu0 %v344, 92
      %v353 = vpop.permute.xlu0 %352
      %354 = vrot.lane.b32.xlu0 %v345, 92
      %v355 = vpop.permute.xlu0 %354
      %356 = vrot.lane.b32.xlu0 %v346, 92
      %v357 = vpop.permute.xlu0 %356
      %358 = vrot.lane.b32.xlu0 %v347, 92
      %v359 = vpop.permute.xlu0 %358
      %vm360 = vcmask 752640
      %v361 = vsel %vm360, %v353, %v355
      %v362 = vsel %vm360, %v355, %v357
      %v363 = vsel %vm360, %v357, %v359
      %367 = vst [vmem:[#allocation2 + $0x90] sm:$0xff] %v361
      %368 = vst [vmem:[#allocation2 + $0x98] sm:$0xff] %v362
      %369 = vst [vmem:[#allocation2 + $0xa0] sm:$0xff] %v363
      %v370 = vld [vmem:[%s197] sm:$0xff]
      %v371 = vld [vmem:[%s197 + $0x8] sm:$0xff]
      %v372 = vld [vmem:[%s197 + $0x10] sm:$0xff]
      %v373 = vld [vmem:[%s197 + $0x18] sm:$0xff]
      %378 = vrot.lane.b32.xlu0 %v370, 91
      %v379 = vpop.permute.xlu0 %378
      %380 = vrot.lane.b32.xlu0 %v371, 91
      %v381 = vpop.permute.xlu0 %380
      %382 = vrot.lane.b32.xlu0 %v372, 91
      %v383 = vpop.permute.xlu0 %382
      %384 = vrot.lane.b32.xlu0 %v373, 91
      %v385 = vpop.permute.xlu0 %384
      %vm386 = vcmask 744448
      %v387 = vsel %vm386, %v379, %v381
      %v388 = vsel %vm386, %v381, %v383
      %v389 = vsel %vm386, %v383, %v385
      %393 = vst [vmem:[#allocation2 + $0xa8] sm:$0xff] %v387
      %394 = vst [vmem:[#allocation2 + $0xb0] sm:$0xff] %v388
      %395 = vst [vmem:[#allocation2 + $0xb8] sm:$0xff] %v389
      %v396 = vld [vmem:[%s197] sm:$0xff]
      %v397 = vld [vmem:[%s197 + $0x8] sm:$0xff]
      %v398 = vld [vmem:[%s197 + $0x10] sm:$0xff]
      %v399 = vld [vmem:[%s197 + $0x18] sm:$0xff]
      %404 = vrot.lane.b32.xlu0 %v396, 90
      %v405 = vpop.permute.xlu0 %404
      %406 = vrot.lane.b32.xlu0 %v397, 90
      %v407 = vpop.permute.xlu0 %406
      %408 = vrot.lane.b32.xlu0 %v398, 90
      %v409 = vpop.permute.xlu0 %408
      %410 = vrot.lane.b32.xlu0 %v399, 90
      %v411 = vpop.permute.xlu0 %410
      %vm412 = vcmask 736256
      %v413 = vsel %vm412, %v405, %v407
      %v414 = vsel %vm412, %v407, %v409
      %v415 = vsel %vm412, %v409, %v411
      %419 = vst [vmem:[#allocation2 + $0xc0] sm:$0xff] %v413
      %420 = vst [vmem:[#allocation2 + $0xc8] sm:$0xff] %v414
      %421 = vst [vmem:[#allocation2 + $0xd0] sm:$0xff] %v415
      %v422 = vld [vmem:[%s1] sm:$0xff]
      %v423 = vld [vmem:[#allocation2] sm:$0xff]
      %v424 = vld [vmem:[#allocation2 + $0x8] sm:$0xff]
      %v425 = vld [vmem:[#allocation2 + $0x10] sm:$0xff]
      %v426 = vld [vmem:[#allocation2 + $0x18] sm:$0xff]
      %v427 = vld [vmem:[#allocation2 + $0x20] sm:$0xff]
      %v428 = vld [vmem:[#allocation2 + $0x28] sm:$0xff]
      %v429 = vld [vmem:[#allocation2 + $0x30] sm:$0xff]
      %v430 = vld [vmem:[#allocation2 + $0x38] sm:$0xff]
      %v431 = vld [vmem:[#allocation2 + $0x40] sm:$0xff]
      %v432 = vld [vmem:[#allocation2 + $0x48] sm:$0xff]
      %v433 = vld [vmem:[#allocation2 + $0x50] sm:$0xff]
      %v434 = vld [vmem:[#allocation2 + $0x58] sm:$0xff]
      %v435 = vld [vmem:[#allocation2 + $0x60] sm:$0xff]
      %v436 = vld [vmem:[#allocation2 + $0x68] sm:$0xff]
      %v437 = vld [vmem:[#allocation2 + $0x70] sm:$0xff]
      %v438 = vld [vmem:[#allocation2 + $0x78] sm:$0xff]
      %v439 = vld [vmem:[#allocation2 + $0x80] sm:$0xff]
      %v440 = vld [vmem:[#allocation2 + $0x88] sm:$0xff]
      %v441 = vld [vmem:[#allocation2 + $0x90] sm:$0xff]
      %v442 = vld [vmem:[#allocation2 + $0x98] sm:$0xff]
      %v443 = vld [vmem:[#allocation2 + $0xa0] sm:$0xff]
      %v444 = vld [vmem:[#allocation2 + $0xa8] sm:$0xff]
      %v445 = vld [vmem:[#allocation2 + $0xb0] sm:$0xff]
      %v446 = vld [vmem:[#allocation2 + $0xb8] sm:$0xff]
      %v447 = vld [vmem:[#allocation2 + $0xc0] sm:$0xff]
      %v448 = vld [vmem:[#allocation2 + $0xc8] sm:$0xff]
      %v449 = vld [vmem:[#allocation2 + $0xd0] sm:$0xff]
      %v450 = vld [vmem:[%s2] sm:$0xff]
      %452 = vset.pattern.permute.xlu0 0
      %453 = vperm.xlu0 %452, %v450
      %v454 = vpop.permute.xlu0 %453
      %vm456 = vcmask 588800
      %v458 = vsel %vm456, %v422, 0
      %460 = vmatpush.msra.mxu0 0.0
      %461 = vmatpush.msra.mxu0 0.0
      %462 = vmatpush.msra.mxu0 0.0
      %463 = vmatpush.msra.mxu0 0.0
      %464 = vmatpush.msra.mxu0 0.0
      %465 = vmatpush.msra.mxu0 0.0
      %466 = vmatpush.msra.mxu0 0.0
      %467 = vmatpush.msra.mxu0 %v447
      %468 = vmatpush.msra.mxu0 %v444
      %469 = vmatpush.msra.mxu0 %v441
      %470 = vmatpush.msra.mxu0 %v438
      %471 = vmatpush.msra.mxu0 %v435
      %472 = vmatpush.msra.mxu0 %v432
      %473 = vmatpush.msra.mxu0 %v429
      %474 = vmatpush.msra.mxu0 %v426
      %475 = vmatpush.msra.mxu0 %v423
      %476 = vmatmul.f32.gmra.mxu0 %v458
      %v477 = vpop.f32.mrf.mxu0
      %v478 = vadd.f32 %v454, %v477
      %479 = vdwg.mxu0
      %480 = vmatpush.msra.mxu0 0.0
      %481 = vmatpush.msra.mxu0 0.0
      %482 = vmatpush.msra.mxu0 0.0
      %483 = vmatpush.msra.mxu0 0.0
      %484 = vmatpush.msra.mxu0 0.0
      %485 = vmatpush.msra.mxu0 0.0
      %486 = vmatpush.msra.mxu0 0.0
      %487 = vmatpush.msra.mxu0 %v448
      %488 = vmatpush.msra.mxu0 %v445
      %489 = vmatpush.msra.mxu0 %v442
      %490 = vmatpush.msra.mxu0 %v439
      %491 = vmatpush.msra.mxu0 %v436
      %492 = vmatpush.msra.mxu0 %v433
      %493 = vmatpush.msra.mxu0 %v430
      %494 = vmatpush.msra.mxu0 %v427
      %495 = vmatpush.msra.mxu0 %v424
      %496 = vmatmul.f32.gmra.mxu0 %v458
      %v497 = vpop.f32.mrf.mxu0
      %v498 = vadd.f32 %v454, %v497
      %499 = vdwg.mxu0
      %500 = vmatpush.msra.mxu0 0.0
      %501 = vmatpush.msra.mxu0 0.0
      %502 = vmatpush.msra.mxu0 0.0
      %503 = vmatpush.msra.mxu0 0.0
      %504 = vmatpush.msra.mxu0 0.0
      %505 = vmatpush.msra.mxu0 0.0
      %506 = vmatpush.msra.mxu0 0.0
      %507 = vmatpush.msra.mxu0 %v449
      %508 = vmatpush.msra.mxu0 %v446
      %509 = vmatpush.msra.mxu0 %v443
      %510 = vmatpush.msra.mxu0 %v440
      %511 = vmatpush.msra.mxu0 %v437
      %512 = vmatpush.msra.mxu0 %v434
      %513 = vmatpush.msra.mxu0 %v431
      %514 = vmatpush.msra.mxu0 %v428
      %515 = vmatpush.msra.mxu0 %v425
      %516 = vmatmul.f32.gmra.mxu0 %v458
      %v517 = vpop.f32.mrf.mxu0
      %v518 = vadd.f32 %v454, %v517
      %519 = vdwg.mxu0
      %520 = vst [vmem:[%s206] sm:$0xff] %v478
      %521 = vst [vmem:[%s206 + $0x8] sm:$0xff] %v498
      %522 = vst [vmem:[%s206 + $0x10] sm:$0xff] %v518
      %s523 = smul.u32 3, %s19
      %p524 = scmp.lt.s32.totalorder %s18, 1
      %s525 = scalar_select %p524, %s18, 1
      %p526 = scmp.lt.s32.totalorder %s523, 2
      %s527 = scalar_select %p526, %s523, 2
      %s528 = smul.addr %s525, 3
      %s529 = sadd.s32 %s527, %s528
      %s530 = smul.addr %s529, 8
      %s531 = scalar_lea.vmem %s3, %s530
      // Predicated region
      $region33: #{basic_conv2d.1} parent=31 // pred_check
        %p532 = pneg %p116
      $region34: #{basic_conv2d.1} parent=31 // pred_check_branch
        %534 = sbr.rel (%p532) target = $region36
      $region35: #{basic_conv2d.1} parent=31 // pred_region
        %s535 = smul.u32 3, %s19
      $region36: #{basic_conv2d.1} parent=31 // pred_fallthru
        _
    $region32: #{basic_conv2d.1} parent=5 // pred_fallthru
      _
    %p536 = scmp.le.s32.totalorder 2, %s9
    // Predicated region
    $region37: #{basic_conv2d.1} parent=5 // pred_check
      %p537 = pneg %p536
    $region38: #{basic_conv2d.1} parent=5 // pred_check_branch
      %539 = sbr.rel (%p537) target = $region40
    $region39: #{basic_conv2d.1} parent=5 // pred_region
      %s540 = ssub.s32 %s9, 2
      // Predicated region
      $region41: #{basic_conv2d.1} parent=39 // pred_check
        %p541 = pneg %p122
      $region42: #{basic_conv2d.1} parent=39 // pred_check_branch
        %543 = sbr.rel (%p541) target = $region44
      $region43: #{basic_conv2d.1} parent=39 // pred_region
        %s544 = smul.u32 3, %s21
        %p545 = scmp.lt.s32.totalorder %s20, 1
        %s546 = scalar_select %p545, %s20, 1
        %p547 = scmp.lt.s32.totalorder %s544, 2
        %s548 = scalar_select %p547, %s544, 2
        %s549 = smul.addr %s546, 3
        %s550 = sadd.s32 %s548, %s549
        %s551 = smul.addr %s550, 8
        %s552 = scalar_lea.vmem %s3, %s551
      $region44: #{basic_conv2d.1} parent=39 // pred_fallthru
        _
    $region40: #{basic_conv2d.1} parent=5 // pred_fallthru
      _
  $region6: #{basic_conv2d.1} parent=0 // loop_footer
    %s13 = sadd.s32 1, %s9
  $region7: #{basic_conv2d.1} parent=0 // loop_footer_branch
    %8 = sbr.rel target = $region3
  $region8: #{basic_conv2d.1} parent=0 // loop_exit
    _

</llo_original>
